<compile_context>
chip_gen: v6e
topology: v6e:2x2x1
jax: 0.10.0
libtpu: 0.0.40
codegen_flags: <defaults>
</compile_context>

<pallas_src>
import jax
import jax.numpy as jnp
from jax import lax
from jax.experimental import pallas as pl
from jax.experimental.pallas import tpu as pltpu


# Contract the last dim of both operands: W (hidden, in) . x_blk (tile, in)^T
NT_DIM_NUMBERS = (((1,), (1,)), ((), ()))


def critic_kernel(x_ref, w1_ref, b1_ref, w2_ref, b2_ref, w3_ref, b3_ref, o_ref):
    # x_ref: (B_TILE, in_dim), row-major block straight from HBM (no transpose pass).
    # Layer 1: (hidden, in_dim) x (B_TILE, in_dim)^T -> (hidden, B_TILE); batch on lanes.
    h1 = lax.dot_general(w1_ref[...], x_ref[...], NT_DIM_NUMBERS,
                         preferred_element_type=jnp.float32)
    h1 = jnp.tanh(h1 + b1_ref[...])                     # bias (hidden,1) broadcasts over lanes

    # Layer 2: (hidden, hidden) @ (hidden, B_TILE) -> (hidden, B_TILE); f32 accumulate.
    h2 = jnp.dot(w2_ref[...], h1.astype(w2_ref.dtype),
                 preferred_element_type=jnp.float32)
    h2 = jnp.tanh(h2 + b2_ref[...])

    # Layer 3 (value head, out_dim == 1): VPU multiply + sublane reduction (XLU)
    # instead of an N=1 MXU matmul.  w3 is (hidden, 1) and broadcasts over lanes.
    v = jnp.sum(h2 * w3_ref[...], axis=0, keepdims=True)     # (1, B_TILE)
    o_ref[...] = (v + b3_ref[0]).astype(o_ref.dtype)          # lane-dense store


def _pick_b_tile(batch, requested):
    """Lane-aligned batch tile: big enough to hide per-step overhead, small enough
    for v5e's 16 MiB scoped VMEM, and (when possible) >= 2 grid steps for v7x."""
    LANE = 128
    t = max(LANE, (requested // LANE) * LANE)
    t = min(t, 8192)                                   # VMEM headroom on v5e/v7x
    batch_lanes = pl.cdiv(batch, LANE) * LANE
    t = min(t, batch_lanes)                            # never bigger than the batch
    if batch_lanes >= 2 * LANE and pl.cdiv(batch, t) < 2:
        t = pl.cdiv(batch_lanes // 2, LANE) * LANE     # keep both v7x cores busy
    return t


def critic_forward(x, params, *, b_tile=2048):
    """x: (B, in_dim), float32 or bfloat16 (bf16 halves the dominant HBM traffic on
    v6e/v7x; accumulation is f32 either way).  params in PyTorch layout:
      w1 (hidden, in_dim), b1 (hidden,), w2 (hidden, hidden), b2 (hidden,),
      w3 (out_dim, hidden), b3 (out_dim,).  Returns (B, out_dim) float32."""
    w1, b1 = params["w1"], params["b1"]
    w2, b2 = params["w2"], params["b2"]
    w3, b3 = params["w3"], params["b3"]

    B, in_dim = x.shape
    hidden = w1.shape[0]
    out_dim = w3.shape[0]
    assert out_dim == 1, "value-head fast path is specialized to out_dim == 1"

    b_tile = _pick_b_tile(B, b_tile)
    num_tiles = pl.cdiv(B, b_tile)

    compute_dtype = x.dtype                     # matmul operand dtype (f32 or bf16)
    w1c = w1.astype(compute_dtype)
    w2c = w2.astype(compute_dtype)
    b1c = b1.reshape(hidden, 1).astype(jnp.float32)
    b2c = b2.reshape(hidden, 1).astype(jnp.float32)
    w3c = w3.reshape(hidden, 1).astype(jnp.float32)
    b3s = b3.reshape(1).astype(jnp.float32)

    def const(shape):
        # Constant index map -> stays VMEM-resident across grid steps (no re-DMA).
        return pl.BlockSpec(shape, lambda i: tuple(0 for _ in shape))

    itemsize = jnp.dtype(compute_dtype).itemsize
    cost = pl.CostEstimate(
        flops=2 * B * (in_dim * hidden + hidden * hidden + hidden),
        transcendentals=2 * B * hidden,
        bytes_accessed=(B * in_dim * itemsize + B * out_dim * 4
                        + (in_dim * hidden + hidden * hidden) * itemsize
                        + (2 * hidden + hidden + out_dim) * 4),
    )

    out = pl.pallas_call(
        critic_kernel,
        out_shape=jax.ShapeDtypeStruct((1, B), jnp.float32),
        grid=(num_tiles,),
        in_specs=[
            pl.BlockSpec((b_tile, in_dim), lambda i: (i, 0)),     # x: row-major batch tiles
            const(w1c.shape),                                     # weights/biases VMEM-resident
            const((hidden, 1)),
            const(w2c.shape),
            const((hidden, 1)),
            const((hidden, 1)),
            pl.BlockSpec(memory_space=pltpu.MemorySpace.SMEM),    # scalar output bias in SMEM
        ],
        out_specs=pl.BlockSpec((1, b_tile), lambda i: (0, i)),    # lane-dense output slab
        compiler_params=pltpu.CompilerParams(
            dimension_semantics=("parallel",),                    # megacore sharding on v7x
            # default scoped VMEM is ample: ~1 MiB x tile + ~1 MiB intermediates at 2048 lanes
        ),
        cost_estimate=cost,
    )(x, w1c, b1c, w2c, b2c, w3c, b3s)

    return out.T                                                  # (B, 1)


def init_critic_params(key, in_dim, hidden_dim=64, out_dim=1):
    """Deterministic init mirroring PyTorch nn.Linear default (uniform +/- 1/sqrt(fan_in)).
    Weights stored in PyTorch layout (out_features, in_features)."""
    def linear(k, fan_in, fan_out):
        kw, kb = jax.random.split(k)
        bound = 1.0 / jnp.sqrt(fan_in)
        w = jax.random.uniform(kw, (fan_out, fan_in), jnp.float32, -bound, bound)
        b = jax.random.uniform(kb, (fan_out,), jnp.float32, -bound, bound)
        return w, b

    k1, k2, k3 = jax.random.split(key, 3)
    w1, b1 = linear(k1, in_dim, hidden_dim)
    w2, b2 = linear(k2, hidden_dim, hidden_dim)
    w3, b3 = linear(k3, hidden_dim, out_dim)
    return {"w1": w1, "b1": b1, "w2": w2, "b2": b2, "w3": w3, "b3": b3}


def critic_reference(x, params):
    h = jnp.tanh(x @ params["w1"].T + params["b1"])
    h = jnp.tanh(h @ params["w2"].T + params["b2"])
    return h @ params["w3"].T + params["b3"]


if __name__ == "__main__":
    key = jax.random.PRNGKey(0)
    k_x, k_p = jax.random.split(key)

    # B deliberately not a multiple of 128 to exercise the clipped boundary block;
    # the tile picker gives a 2-step pipelined grid at this size.
    B, in_dim, hidden_dim, out_dim = 200, 16, 64, 1
    x = jax.random.normal(k_x, (B, in_dim), jnp.float32)
    params = init_critic_params(k_p, in_dim, hidden_dim, out_dim)

    out = jax.block_until_ready(critic_forward(x, params))
    ref = critic_reference(x, params)
    assert out.shape == (B, out_dim), out.shape
    # f32 MXU / EUP rounding differs slightly from the XLA reference path.
    assert jnp.allclose(out, ref, atol=1e-4, rtol=1e-4)

    # bf16 input path (halves the dominant HBM traffic on v6e/v7x); dots still
    # accumulate in f32, so the value estimate only moves at bf16 storage precision.
    out_bf16 = jax.block_until_ready(critic_forward(x.astype(jnp.bfloat16), params))
    assert out_bf16.shape == (B, out_dim)
    assert jnp.allclose(out_bf16, ref, atol=1e-1, rtol=1e-1)

    print("KERNEL_OK")
</pallas_src>

<mosaic_0001>
module attributes {stable_mosaic.version = 11 : i64} {
  func.func @critic_kernel(%arg0: i32, %arg1: memref<128x16xf32, #tpu.memory_space<vmem>>, %arg2: memref<64x16xf32, #tpu.memory_space<vmem>>, %arg3: memref<64x1xf32, #tpu.memory_space<vmem>>, %arg4: memref<64x64xf32, #tpu.memory_space<vmem>>, %arg5: memref<64x1xf32, #tpu.memory_space<vmem>>, %arg6: memref<64x1xf32, #tpu.memory_space<vmem>>, %arg7: memref<1xf32, #tpu.memory_space<smem>>, %arg8: memref<1x128xf32, #tpu.memory_space<vmem>>) attributes {dimension_semantics = [#tpu.dimension_semantics<parallel>], iteration_bounds = array<i64: 2>, scalar_prefetch = 0 : i64, scratch_operands = 0 : i64, tpu.core_type = #tpu.core_type<tc>, window_params = [{transform_indices = @transform_0, window_bounds = array<i64: 128, 16>}, {pipeline_mode = #tpu.pipeline_mode<synchronous>, transform_indices = @transform_1, window_bounds = array<i64: 64, 16>}, {pipeline_mode = #tpu.pipeline_mode<synchronous>, transform_indices = @transform_2, window_bounds = array<i64: 64, 1>}, {pipeline_mode = #tpu.pipeline_mode<synchronous>, transform_indices = @transform_3, window_bounds = array<i64: 64, 64>}, {pipeline_mode = #tpu.pipeline_mode<synchronous>, transform_indices = @transform_4, window_bounds = array<i64: 64, 1>}, {pipeline_mode = #tpu.pipeline_mode<synchronous>, transform_indices = @transform_5, window_bounds = array<i64: 64, 1>}, {transform_indices = @transform_6, window_bounds = array<i64: 1>}, {transform_indices = @transform_7, window_bounds = array<i64: 1, 128>}]} {
    %c0 = arith.constant 0 : index
    %c0_0 = arith.constant 0 : index
    %0 = vector.load %arg2[%c0, %c0_0] : memref<64x16xf32, #tpu.memory_space<vmem>>, vector<64x16xf32>
    %c0_1 = arith.constant 0 : index
    %c0_2 = arith.constant 0 : index
    %1 = vector.load %arg1[%c0_1, %c0_2] : memref<128x16xf32, #tpu.memory_space<vmem>>, vector<128x16xf32>
    %cst = arith.constant dense<0.000000e+00> : vector<64x128xf32>
    %2 = tpu.matmul %0, %1, %cst {dimension_numbers = #tpu.dot_dimension_numbers<[1], [1], [0], [0], [0, 0, 1, 0], [], []>} : vector<64x16xf32>, vector<128x16xf32>, vector<64x128xf32> -> vector<64x128xf32>
    %c0_3 = arith.constant 0 : index
    %c0_4 = arith.constant 0 : index
    %3 = vector.load %arg3[%c0_3, %c0_4] : memref<64x1xf32, #tpu.memory_space<vmem>>, vector<64x1xf32>
    %4 = vector.broadcast %3 : vector<64x1xf32> to vector<64x128xf32>
    %5 = arith.addf %2, %4 : vector<64x128xf32>
    %6 = math.tanh %5 : vector<64x128xf32>
    %c0_5 = arith.constant 0 : index
    %c0_6 = arith.constant 0 : index
    %7 = vector.load %arg4[%c0_5, %c0_6] : memref<64x64xf32, #tpu.memory_space<vmem>>, vector<64x64xf32>
    %cst_7 = arith.constant dense<0.000000e+00> : vector<64x128xf32>
    %8 = tpu.matmul %7, %6, %cst_7 {dimension_numbers = #tpu.dot_dimension_numbers<[1], [0], [0], [1], [0, 0, 1, 1], [], []>} : vector<64x64xf32>, vector<64x128xf32>, vector<64x128xf32> -> vector<64x128xf32>
    %c0_8 = arith.constant 0 : index
    %c0_9 = arith.constant 0 : index
    %9 = vector.load %arg5[%c0_8, %c0_9] : memref<64x1xf32, #tpu.memory_space<vmem>>, vector<64x1xf32>
    %10 = vector.broadcast %9 : vector<64x1xf32> to vector<64x128xf32>
    %11 = arith.addf %8, %10 : vector<64x128xf32>
    %12 = math.tanh %11 : vector<64x128xf32>
    %c0_10 = arith.constant 0 : index
    %c0_11 = arith.constant 0 : index
    %13 = vector.load %arg6[%c0_10, %c0_11] : memref<64x1xf32, #tpu.memory_space<vmem>>, vector<64x1xf32>
    %14 = vector.broadcast %13 : vector<64x1xf32> to vector<64x128xf32>
    %15 = arith.mulf %12, %14 : vector<64x128xf32>
    %cst_12 = arith.constant dense<0.000000e+00> : vector<128xf32>
    %16 = vector.multi_reduction <add>, %15, %cst_12 [0] : vector<64x128xf32> to vector<128xf32>
    %17 = vector.shape_cast %16 : vector<128xf32> to vector<1x128xf32>
    %c0_13 = arith.constant 0 : index
    %18 = memref.load %arg7[%c0_13] : memref<1xf32, #tpu.memory_space<smem>>
    %19 = vector.broadcast %18 : f32 to vector<1x128xf32>
    %20 = arith.addf %17, %19 : vector<1x128xf32>
    %c0_14 = arith.constant 0 : index
    %c0_15 = arith.constant 0 : index
    %21 = vector.load %arg8[%c0_14, %c0_15] : memref<1x128xf32, #tpu.memory_space<vmem>>, vector<1x128xf32>
    tpu.vector_store %arg8[%c0_14, %c0_15], %20 {strides = array<i32>} : memref<1x128xf32, #tpu.memory_space<vmem>>, vector<1x128xf32>,
    return
  }
  func.func @transform_0(%arg0: i32) -> (i32, i32) {
    %c0_i32 = arith.constant 0 : i32
    %c0_i32_0 = arith.constant 0 : i32
    return %arg0, %c0_i32 : i32, i32
  }
  func.func @transform_1(%arg0: i32) -> (i32, i32) {
    %c0_i32 = arith.constant 0 : i32
    %c0_i32_0 = arith.constant 0 : i32
    %c0_i32_1 = arith.constant 0 : i32
    return %c0_i32, %c0_i32_0 : i32, i32
  }
  func.func @transform_2(%arg0: i32) -> (i32, i32) {
    %c0_i32 = arith.constant 0 : i32
    %c0_i32_0 = arith.constant 0 : i32
    %c0_i32_1 = arith.constant 0 : i32
    return %c0_i32, %c0_i32_0 : i32, i32
  }
  func.func @transform_3(%arg0: i32) -> (i32, i32) {
    %c0_i32 = arith.constant 0 : i32
    %c0_i32_0 = arith.constant 0 : i32
    %c0_i32_1 = arith.constant 0 : i32
    return %c0_i32, %c0_i32_0 : i32, i32
  }
  func.func @transform_4(%arg0: i32) -> (i32, i32) {
    %c0_i32 = arith.constant 0 : i32
    %c0_i32_0 = arith.constant 0 : i32
    %c0_i32_1 = arith.constant 0 : i32
    return %c0_i32, %c0_i32_0 : i32, i32
  }
  func.func @transform_5(%arg0: i32) -> (i32, i32) {
    %c0_i32 = arith.constant 0 : i32
    %c0_i32_0 = arith.constant 0 : i32
    %c0_i32_1 = arith.constant 0 : i32
    return %c0_i32, %c0_i32_0 : i32, i32
  }
  func.func @transform_6(%arg0: i32) -> i32 {
    %c0_i32 = arith.constant 0 : i32
    %c0_i32_0 = arith.constant 0 : i32
    return %c0_i32 : i32
  }
  func.func @transform_7(%arg0: i32) -> (i32, i32) {
    %c0_i32 = arith.constant 0 : i32
    %c0_i32_0 = arith.constant 0 : i32
    return %c0_i32, %arg0 : i32, i32
  }
}

</mosaic_0001>

<llo_original>
// kernel: tpu_custom_call.1
$region0: #{tpu_custom_call.1}
  #allocation0 [shape = 'u32[]', space=smem, size = 0x4, offset = 0x4, fixed_abs, tag = 'smem constant byte address 0x4 - core index']
  #allocation1 [shape = 'u32[144,128]{1,0:T(1,128)}', space=vmem, size = 0x12000, scoped, tag = 'internal scratch']
  #allocation2 [shape = 'f32[1]{0:T(128)S(6)}', space=smem, size = 0x200, scoped, tag = 'scoped memory for tpu_custom_call.1']
  %s0 = inlined_call_operand.vmem [shape: f32[200,16], index: 0, kind: input, shape index: {}]
  %s1 = inlined_call_operand.vmem [shape: f32[64,16], index: 1, kind: input, shape index: {}]
  %s2 = inlined_call_operand.vmem [shape: f32[64,1], index: 2, kind: input, shape index: {}]
  %s3 = inlined_call_operand.vmem [shape: f32[64,64], index: 3, kind: input, shape index: {}]
  %s4 = inlined_call_operand.vmem [shape: f32[64,1], index: 4, kind: input, shape index: {}]
  %s5 = inlined_call_operand.vmem [shape: f32[64,1], index: 5, kind: input, shape index: {}]
  %s6 = inlined_call_operand.<no memory space> [shape: f32[1], index: 6, kind: input, shape index: {}]
  %s7 = inlined_call_operand.hbm [shape: f32[1,200], index: 7, kind: output, shape index: {}]
  %s8 = sld [smem:[#allocation0]]
  $region61: #{tpu_custom_call.1} parent=0
    _
  %s10 = ssub.s32 1, %s8
  %s11 = scalar_select 0, %s10, %s8
  %12 = sst [smem:[#allocation2]] %s6
  $region1: #{tpu_custom_call.1} parent=0
    #allocation3 [shape = 'u8[1024]{0}', space=vmem, size = 0x400, scoped, tag = 'output window, operand 0']
    #allocation4 [shape = 's32[2]{0}', space=sflag, size = 0x8, scoped, tag = 'scoped memory for tpu_custom_call.1']
    %13 = vsyncpa [#allocation4], 0
    %s14 = scalar_lea.sflag [#allocation4], 1
    %15 = vsyncpa %s14, 0
    loop: start=0, step=1, limit=4
    $region2: #{tpu_custom_call.1} parent=1 // loop_pre_header
      _
    $region3: #{tpu_custom_call.1} parent=1 // loop_header
      %s17 = sphi 0, %s21
      %p18 = scmp.ge.s32.totalorder %s17, 4
      %s27 = sphi 0, %s29
      %s30 = sphi 0, %s27
      %s31 = sphi 0, %s30
      %s47 = sphi 0, %s31
      %s51 = sphi 0, %s51
      %s53 = sphi 0, %s51
      %s54 = sphi 0, %s53
      %s68 = sphi 0, %s54
      %s72 = sphi 0, %s72
      %s74 = sphi 0, %s72
      %s75 = sphi 0, %s74
      %s89 = sphi 0, %s75
      %s93 = sphi 0, %s93
      %s95 = sphi 0, %s93
      %s96 = sphi 0, %s95
      %s110 = sphi 0, %s96
      %s114 = sphi 0, %s114
      %s116 = sphi 0, %s114
      %s117 = sphi 0, %s116
      %s131 = sphi 0, %s117
      %s135 = sphi 0, %s135
      %s137 = sphi 0, %s135
      %s138 = sphi 0, %s137
      %s152 = sphi 0, %s138
      %s156 = sphi 0, %s156
      %s158 = sphi 0, %s156
      %s159 = sphi 0, %s158
      %s173 = sphi 0, %s159
      %s179 = sphi 0, %s181
      %s182 = sphi 0, %s179
      %s183 = sphi 0, %s182
      %s199 = sphi 0, %s183
    $region4: #{tpu_custom_call.1} parent=1 // loop_header_branch
      %20 = sbr.rel (%p18) target = $region8
    $region5: #{tpu_custom_call.1} parent=1 // loop_body
      %s22 = ssub.s32 %s17, 1
      %s23 = ssub.s32 %s17, 2
      %s24 = sadd.s32 %s17, 1
      %s25 = ssub.s32 %s17, %s24
      %p26 = scmp.eq.s32.totalorder %s25, 0
      %s28 = sadd.s32 %s27, 1
      %s29 = scalar_select %p26, %s27, %s28
      %p32 = pneg %p26
      %p33 = scmp.eq.s32.totalorder %s17, 1
      %p34 = por %p32, %p33
      %p35 = scmp.ne.s32.totalorder %s27, %s30
      %p36 = scmp.eq.s32.totalorder %s17, 0
      %p37 = por %p35, %p36
      %p38 = scmp.ne.s32.totalorder %s27, %s30
      %p39 = scmp.eq.s32.totalorder %s22, 1
      %p40 = por %p38, %p39
      %p41 = scmp.ne.s32.totalorder %s30, %s31
      %p42 = scmp.eq.s32.totalorder %s22, 0
      %p43 = por %p41, %p42
      %p44 = scmp.ne.s32.totalorder %s30, %s31
      %p45 = scmp.eq.s32.totalorder %s23, 1
      %p46 = por %p44, %p45
      %p48 = scmp.ne.s32.totalorder %s31, %s47
      %p49 = scmp.eq.s32.totalorder %s23, 0
      %p50 = por %p48, %p49
      %s52 = sadd.s32 %s51, 1
      %p55 = scmp.eq.s32.totalorder %s17, 1
      %p56 = scmp.ne.s32.totalorder %s51, %s53
      %p57 = scmp.eq.s32.totalorder %s17, 0
      %p58 = por %p56, %p57
      %p59 = scmp.ne.s32.totalorder %s51, %s53
      %p60 = scmp.eq.s32.totalorder %s22, 1
      %p61 = por %p59, %p60
      %p62 = scmp.ne.s32.totalorder %s53, %s54
      %p63 = scmp.eq.s32.totalorder %s22, 0
      %p64 = por %p62, %p63
      %p65 = scmp.ne.s32.totalorder %s53, %s54
      %p66 = scmp.eq.s32.totalorder %s23, 1
      %p67 = por %p65, %p66
      %p69 = scmp.ne.s32.totalorder %s54, %s68
      %p70 = scmp.eq.s32.totalorder %s23, 0
      %p71 = por %p69, %p70
      %s73 = sadd.s32 %s72, 1
      %p76 = scmp.eq.s32.totalorder %s17, 1
      %p77 = scmp.ne.s32.totalorder %s72, %s74
      %p78 = scmp.eq.s32.totalorder %s17, 0
      %p79 = por %p77, %p78
      %p80 = scmp.ne.s32.totalorder %s72, %s74
      %p81 = scmp.eq.s32.totalorder %s22, 1
      %p82 = por %p80, %p81
      %p83 = scmp.ne.s32.totalorder %s74, %s75
      %p84 = scmp.eq.s32.totalorder %s22, 0
      %p85 = por %p83, %p84
      %p86 = scmp.ne.s32.totalorder %s74, %s75
      %p87 = scmp.eq.s32.totalorder %s23, 1
      %p88 = por %p86, %p87
      %p90 = scmp.ne.s32.totalorder %s75, %s89
      %p91 = scmp.eq.s32.totalorder %s23, 0
      %p92 = por %p90, %p91
      %s94 = sadd.s32 %s93, 1
      %p97 = scmp.eq.s32.totalorder %s17, 1
      %p98 = scmp.ne.s32.totalorder %s93, %s95
      %p99 = scmp.eq.s32.totalorder %s17, 0
      %p100 = por %p98, %p99
      %p101 = scmp.ne.s32.totalorder %s93, %s95
      %p102 = scmp.eq.s32.totalorder %s22, 1
      %p103 = por %p101, %p102
      %p104 = scmp.ne.s32.totalorder %s95, %s96
      %p105 = scmp.eq.s32.totalorder %s22, 0
      %p106 = por %p104, %p105
      %p107 = scmp.ne.s32.totalorder %s95, %s96
      %p108 = scmp.eq.s32.totalorder %s23, 1
      %p109 = por %p107, %p108
      %p111 = scmp.ne.s32.totalorder %s96, %s110
      %p112 = scmp.eq.s32.totalorder %s23, 0
      %p113 = por %p111, %p112
      %s115 = sadd.s32 %s114, 1
      %p118 = scmp.eq.s32.totalorder %s17, 1
      %p119 = scmp.ne.s32.totalorder %s114, %s116
      %p120 = scmp.eq.s32.totalorder %s17, 0
      %p121 = por %p119, %p120
      %p122 = scmp.ne.s32.totalorder %s114, %s116
      %p123 = scmp.eq.s32.totalorder %s22, 1
      %p124 = por %p122, %p123
      %p125 = scmp.ne.s32.totalorder %s116, %s117
      %p126 = scmp.eq.s32.totalorder %s22, 0
      %p127 = por %p125, %p126
      %p128 = scmp.ne.s32.totalorder %s116, %s117
      %p129 = scmp.eq.s32.totalorder %s23, 1
      %p130 = por %p128, %p129
      %p132 = scmp.ne.s32.totalorder %s117, %s131
      %p133 = scmp.eq.s32.totalorder %s23, 0
      %p134 = por %p132, %p133
      %s136 = sadd.s32 %s135, 1
      %p139 = scmp.eq.s32.totalorder %s17, 1
      %p140 = scmp.ne.s32.totalorder %s135, %s137
      %p141 = scmp.eq.s32.totalorder %s17, 0
      %p142 = por %p140, %p141
      %p143 = scmp.ne.s32.totalorder %s135, %s137
      %p144 = scmp.eq.s32.totalorder %s22, 1
      %p145 = por %p143, %p144
      %p146 = scmp.ne.s32.totalorder %s137, %s138
      %p147 = scmp.eq.s32.totalorder %s22, 0
      %p148 = por %p146, %p147
      %p149 = scmp.ne.s32.totalorder %s137, %s138
      %p150 = scmp.eq.s32.totalorder %s23, 1
      %p151 = por %p149, %p150
      %p153 = scmp.ne.s32.totalorder %s138, %s152
      %p154 = scmp.eq.s32.totalorder %s23, 0
      %p155 = por %p153, %p154
      %s157 = sadd.s32 %s156, 1
      %p160 = scmp.eq.s32.totalorder %s17, 1
      %p161 = scmp.ne.s32.totalorder %s156, %s158
      %p162 = scmp.eq.s32.totalorder %s17, 0
      %p163 = por %p161, %p162
      %p164 = scmp.ne.s32.totalorder %s156, %s158
      %p165 = scmp.eq.s32.totalorder %s22, 1
      %p166 = por %p164, %p165
      %p167 = scmp.ne.s32.totalorder %s158, %s159
      %p168 = scmp.eq.s32.totalorder %s22, 0
      %p169 = por %p167, %p168
      %p170 = scmp.ne.s32.totalorder %s158, %s159
      %p171 = scmp.eq.s32.totalorder %s23, 1
      %p172 = por %p170, %p171
      %p174 = scmp.ne.s32.totalorder %s159, %s173
      %p175 = scmp.eq.s32.totalorder %s23, 0
      %p176 = por %p174, %p175
      %s177 = ssub.s32 %s17, %s24
      %p178 = scmp.eq.s32.totalorder %s177, 0
      %s180 = sadd.s32 %s179, 1
      %s181 = scalar_select %p178, %s179, %s180
      %p184 = pneg %p178
      %p185 = scmp.eq.s32.totalorder %s17, 1
      %p186 = por %p184, %p185
      %p187 = scmp.ne.s32.totalorder %s179, %s182
      %p188 = scmp.eq.s32.totalorder %s17, 0
      %p189 = por %p187, %p188
      %p190 = scmp.ne.s32.totalorder %s179, %s182
      %p191 = scmp.eq.s32.totalorder %s22, 1
      %p192 = por %p190, %p191
      %p193 = scmp.ne.s32.totalorder %s182, %s183
      %p194 = scmp.eq.s32.totalorder %s22, 0
      %p195 = por %p193, %p194
      %p196 = scmp.ne.s32.totalorder %s182, %s183
      %p197 = scmp.eq.s32.totalorder %s23, 1
      %p198 = por %p196, %p197
      %p200 = scmp.ne.s32.totalorder %s183, %s199
      %p201 = scmp.eq.s32.totalorder %s23, 0
      %p202 = por %p200, %p201
      %p203 = scmp.le.s32.totalorder 1, %s17
      %p204 = scmp.lt.s32.totalorder %s17, 3
      %p205 = pnand %p203, %p204
      %p206 = pneg %p205
      // Predicated region
      $region9: #{tpu_custom_call.1} parent=5 // pred_check
        _
      $region10: #{tpu_custom_call.1} parent=5 // pred_check_branch
        %208 = sbr.rel (%p205) target = $region12
      $region11: #{tpu_custom_call.1} parent=5 // pred_region
        %s209 = ssub.s32 %s17, 1
        // Predicated region
        $region13: #{tpu_custom_call.1} parent=11 // pred_check
          %p210 = pneg %p64
        $region14: #{tpu_custom_call.1} parent=11 // pred_check_branch
          %212 = sbr.rel (%p210) target = $region16
        $region15: #{tpu_custom_call.1} parent=11 // pred_region
          _
        $region16: #{tpu_custom_call.1} parent=11 // pred_fallthru
          _
        // Predicated region
        $region17: #{tpu_custom_call.1} parent=11 // pred_check
          %p213 = pneg %p85
        $region18: #{tpu_custom_call.1} parent=11 // pred_check_branch
          %215 = sbr.rel (%p213) target = $region20
        $region19: #{tpu_custom_call.1} parent=11 // pred_region
          _
        $region20: #{tpu_custom_call.1} parent=11 // pred_fallthru
          _
        // Predicated region
        $region21: #{tpu_custom_call.1} parent=11 // pred_check
          %p216 = pneg %p106
        $region22: #{tpu_custom_call.1} parent=11 // pred_check_branch
          %218 = sbr.rel (%p216) target = $region24
        $region23: #{tpu_custom_call.1} parent=11 // pred_region
          _
        $region24: #{tpu_custom_call.1} parent=11 // pred_fallthru
          _
        // Predicated region
        $region25: #{tpu_custom_call.1} parent=11 // pred_check
          %p219 = pneg %p127
        $region26: #{tpu_custom_call.1} parent=11 // pred_check_branch
          %221 = sbr.rel (%p219) target = $region28
        $region27: #{tpu_custom_call.1} parent=11 // pred_region
          _
        $region28: #{tpu_custom_call.1} parent=11 // pred_fallthru
          _
        // Predicated region
        $region29: #{tpu_custom_call.1} parent=11 // pred_check
          %p222 = pneg %p148
        $region30: #{tpu_custom_call.1} parent=11 // pred_check_branch
          %224 = sbr.rel (%p222) target = $region32
        $region31: #{tpu_custom_call.1} parent=11 // pred_region
          _
        $region32: #{tpu_custom_call.1} parent=11 // pred_fallthru
          _
        // Predicated region
        $region33: #{tpu_custom_call.1} parent=11 // pred_check
          %p225 = pneg %p169
        $region34: #{tpu_custom_call.1} parent=11 // pred_check_branch
          %227 = sbr.rel (%p225) target = $region36
        $region35: #{tpu_custom_call.1} parent=11 // pred_region
          _
        $region36: #{tpu_custom_call.1} parent=11 // pred_fallthru
          _
      $region12: #{tpu_custom_call.1} parent=5 // pred_fallthru
        _
      %p228 = scmp.lt.s32.totalorder %s17, 2
      // Predicated region
      $region37: #{tpu_custom_call.1} parent=5 // pred_check
        %p229 = pneg %p228
      $region38: #{tpu_custom_call.1} parent=5 // pred_check_branch
        %231 = sbr.rel (%p229) target = $region40
      $region39: #{tpu_custom_call.1} parent=5 // pred_region
        // Predicated region
        $region41: #{tpu_custom_call.1} parent=39 // pred_check
          %p232 = pneg %p37
        $region42: #{tpu_custom_call.1} parent=39 // pred_check_branch
          %234 = sbr.rel (%p232) target = $region44
        $region43: #{tpu_custom_call.1} parent=39 // pred_region
          %s235 = smul.u32 16, %s17
          %s236 = ssub.s32 25, %s235
          %p237 = scmp.lt.s32.totalorder %s236, 16
          %s238 = scalar_select %p237, %s236, 16
          %s239 = smul.u32 128, %s238
          %p240 = scmp.lt.s32.totalorder %s235, 24
          %s241 = scalar_select %p240, %s235, 24
          %s242 = smul.addr %s241, 8
          %s243 = scalar_lea.vmem %s0, %s242
          %s244 = smul.u32 16, %s17
          %s245 = ssub.s32 25, %s244
          %p246 = scmp.lt.s32.totalorder %s245, 16
          %s247 = scalar_select %p246, %s245, 16
          %s248 = smul.u32 128, %s247
        $region44: #{tpu_custom_call.1} parent=39 // pred_fallthru
          _
      $region40: #{tpu_custom_call.1} parent=5 // pred_fallthru
        _
      %p249 = scmp.le.s32.totalorder 1, %s17
      %p250 = scmp.lt.s32.totalorder %s17, 3
      %p251 = pnand %p249, %p250
      %p252 = pneg %p251
      // Predicated region
      $region45: #{tpu_custom_call.1} parent=5 // pred_check
        _
      $region46: #{tpu_custom_call.1} parent=5 // pred_check_branch
        %254 = sbr.rel (%p251) target = $region48
      $region47: #{tpu_custom_call.1} parent=5 // pred_region
        %s255 = ssub.s32 %s17, 1
        %s256 = smul.u32 16, %s22
        %s257 = ssub.s32 25, %s256
        %p258 = scmp.lt.s32.totalorder %s257, 16
        %s259 = scalar_select %p258, %s257, 16
        %s260 = smul.u32 128, %s259
        %p261 = scmp.lt.s32.totalorder %s256, 24
        %s262 = scalar_select %p261, %s256, 24
        %s263 = smul.addr %s262, 8
        %s264 = scalar_lea.vmem %s0, %s263
        %p265 = pneg %p43
        %p266 = pneg %p40
        %p267 = pneg %p64
        %p268 = pneg %p61
        %p269 = pneg %p85
        %p270 = pneg %p82
        %p271 = pneg %p106
        %p272 = pneg %p103
        %p273 = pneg %p127
        %p274 = pneg %p124
        %p275 = pneg %p148
        %p276 = pneg %p145
        %p277 = pneg %p169
        %p278 = pneg %p166
        %p279 = pneg %p195
        %p280 = pneg %p192
        %s281 = sand.u32 %s182, 1
        %s282 = scalar_lea.sflag [#allocation4], %s281
        %s283 = sand.u32 %s182, 1
        %s284 = scalar_lea.vmem [#allocation3], %s283
        %s285 = smul.u32 16, %s22
        %s286 = ssub.s32 25, %s285
        %p287 = scmp.lt.s32.totalorder %s286, 16
        %s288 = scalar_select %p287, %s286, 16
        %s289 = smul.u32 128, %s288
        %p290 = scmp.lt.s32.totalorder %s285, 24
        %s291 = scalar_select %p290, %s285, 24
        %s292 = smul.addr %s291, 8
        %s293 = scalar_lea.vmem %s0, %s292
        %s294 = smul.u32 16, %s22
        %s295 = ssub.s32 25, %s294
        %p296 = scmp.lt.s32.totalorder %s295, 16
        %s297 = scalar_select %p296, %s295, 16
        %s298 = smul.u32 128, %s297
        %v299 = vld [vmem:[%s1] sm:$0xff]
        %v300 = vld [vmem:[%s1 + $0x8] sm:$0xff]
        %v301 = vld [vmem:[%s1 + $0x10] sm:$0xff]
        %v302 = vld [vmem:[%s1 + $0x18] sm:$0xff]
        %v303 = vld [vmem:[%s1 + $0x20] sm:$0xff]
        %v304 = vld [vmem:[%s1 + $0x28] sm:$0xff]
        %v305 = vld [vmem:[%s1 + $0x30] sm:$0xff]
        %v306 = vld [vmem:[%s1 + $0x38] sm:$0xff]
        %v307 = vld [vmem:[%s293] sm:$0xff]
        %v308 = vld [vmem:[%s293 + $0x8] sm:$0xff]
        %v309 = vld [vmem:[%s293 + $0x10] sm:$0xff]
        %v310 = vld [vmem:[%s293 + $0x18] sm:$0xff]
        %v311 = vld [vmem:[%s293 + $0x20] sm:$0xff]
        %v312 = vld [vmem:[%s293 + $0x28] sm:$0xff]
        %v313 = vld [vmem:[%s293 + $0x30] sm:$0xff]
        %v314 = vld [vmem:[%s293 + $0x38] sm:$0xff]
        %v315 = vld [vmem:[%s293 + $0x40] sm:$0xff]
        %v316 = vld [vmem:[%s293 + $0x48] sm:$0xff]
        %v317 = vld [vmem:[%s293 + $0x50] sm:$0xff]
        %v318 = vld [vmem:[%s293 + $0x58] sm:$0xff]
        %v319 = vld [vmem:[%s293 + $0x60] sm:$0xff]
        %v320 = vld [vmem:[%s293 + $0x68] sm:$0xff]
        %v321 = vld [vmem:[%s293 + $0x70] sm:$0xff]
        %v322 = vld [vmem:[%s293 + $0x78] sm:$0xff]
        %v323 = vld [vmem:[%s2] sm:$0xff]
        %v324 = vld [vmem:[%s2 + $0x8] sm:$0xff]
        %v325 = vld [vmem:[%s2 + $0x10] sm:$0xff]
        %v326 = vld [vmem:[%s2 + $0x18] sm:$0xff]
        %v327 = vld [vmem:[%s2 + $0x20] sm:$0xff]
        %v328 = vld [vmem:[%s2 + $0x28] sm:$0xff]
        %v329 = vld [vmem:[%s2 + $0x30] sm:$0xff]
        %v330 = vld [vmem:[%s2 + $0x38] sm:$0xff]
        %332 = vset.pattern.permute.xlu0 0
        %333 = vperm.xlu0 %332, %v323
        %v334 = vpop.permute.xlu0 %333
        %337 = vset.pattern.permute.xlu0 0
        %338 = vperm.xlu0 %337, %v324
        %v339 = vpop.permute.xlu0 %338
        %342 = vset.pattern.permute.xlu0 0
        %343 = vperm.xlu0 %342, %v325
        %v344 = vpop.permute.xlu0 %343
        %347 = vset.pattern.permute.xlu0 0
        %348 = vperm.xlu0 %347, %v326
        %v349 = vpop.permute.xlu0 %348
        %352 = vset.pattern.permute.xlu0 0
        %353 = vperm.xlu0 %352, %v327
        %v354 = vpop.permute.xlu0 %353
        %357 = vset.pattern.permute.xlu0 0
        %358 = vperm.xlu0 %357, %v328
        %v359 = vpop.permute.xlu0 %358
        %362 = vset.pattern.permute.xlu0 0
        %363 = vperm.xlu0 %362, %v329
        %v364 = vpop.permute.xlu0 %363
        %367 = vset.pattern.permute.xlu0 0
        %368 = vperm.xlu0 %367, %v330
        %v369 = vpop.permute.xlu0 %368
        %vm371 = vcmask 130048
        %v373 = vsel %vm371, %v299, 0
        %v376 = vsel %vm371, %v300, 0
        %v379 = vsel %vm371, %v301, 0
        %v382 = vsel %vm371, %v302, 0
        %v385 = vsel %vm371, %v303, 0
        %v388 = vsel %vm371, %v304, 0
        %v391 = vsel %vm371, %v305, 0
        %v394 = vsel %vm371, %v306, 0
        %v397 = vsel %vm371, %v307, 0
        %v400 = vsel %vm371, %v308, 0
        %v403 = vsel %vm371, %v309, 0
        %v406 = vsel %vm371, %v310, 0
        %v409 = vsel %vm371, %v311, 0
        %v412 = vsel %vm371, %v312, 0
        %v415 = vsel %vm371, %v313, 0
        %v418 = vsel %vm371, %v314, 0
        %v421 = vsel %vm371, %v315, 0
        %v424 = vsel %vm371, %v316, 0
        %v427 = vsel %vm371, %v317, 0
        %v430 = vsel %vm371, %v318, 0
        %v433 = vsel %vm371, %v319, 0
        %v436 = vsel %vm371, %v320, 0
        %v439 = vsel %vm371, %v321, 0
        %v442 = vsel %vm371, %v322, 0
        %444 = vmatprep.subr.mxu0 0.0
        %445 = vmatpush1.xpose.msra.mxu0 %v442
        %446 = vmatprep.subr.mxu0 0.0
        %447 = vmatpush1.xpose.msra.mxu0 %v439
        %448 = vmatprep.subr.mxu0 0.0
        %449 = vmatpush1.xpose.msra.mxu0 %v436
        %450 = vmatprep.subr.mxu0 0.0
        %451 = vmatpush1.xpose.msra.mxu0 %v433
        %452 = vmatprep.subr.mxu0 0.0
        %453 = vmatpush1.xpose.msra.mxu0 %v430
        %454 = vmatprep.subr.mxu0 0.0
        %455 = vmatpush1.xpose.msra.mxu0 %v427
        %456 = vmatprep.subr.mxu0 0.0
        %457 = vmatpush1.xpose.msra.mxu0 %v424
        %458 = vmatprep.subr.mxu0 0.0
        %459 = vmatpush1.xpose.msra.mxu0 %v421
        %460 = vmatprep.subr.mxu0 0.0
        %461 = vmatpush1.xpose.msra.mxu0 %v418
        %462 = vmatprep.subr.mxu0 0.0
        %463 = vmatpush1.xpose.msra.mxu0 %v415
        %464 = vmatprep.subr.mxu0 0.0
        %465 = vmatpush1.xpose.msra.mxu0 %v412
        %466 = vmatprep.subr.mxu0 0.0
        %467 = vmatpush1.xpose.msra.mxu0 %v409
        %468 = vmatprep.subr.mxu0 0.0
        %469 = vmatpush1.xpose.msra.mxu0 %v406
        %470 = vmatprep.subr.mxu0 0.0
        %471 = vmatpush1.xpose.msra.mxu0 %v403
        %472 = vmatprep.subr.mxu0 0.0
        %473 = vmatpush1.xpose.msra.mxu0 %v400
        %474 = vmatprep.subr.mxu0 0.0
        %475 = vmatpush1.xpose.msra.mxu0 %v397
        %476 = vmatprep.subr.mxu0 0.0
        %477 = vmatpush2.xpose.msra.mxu0 0.0
        %478 = vmatprep.subr.mxu0 0.0
        %479 = vmatpush2.xpose.msra.mxu0 0.0
        %480 = vmatprep.subr.mxu0 0.0
        %481 = vmatpush2.xpose.msra.mxu0 0.0
        %482 = vmatprep.subr.mxu0 0.0
        %483 = vmatpush2.xpose.msra.mxu0 0.0
        %484 = vmatprep.subr.mxu0 0.0
        %485 = vmatpush2.xpose.msra.mxu0 0.0
        %486 = vmatprep.subr.mxu0 0.0
        %487 = vmatpush2.xpose.msra.mxu0 0.0
        %488 = vmatprep.subr.mxu0 0.0
        %489 = vmatpush2.xpose.msra.mxu0 0.0
        %490 = vmatprep.subr.mxu0 0.0
        %491 = vmatpush2.xpose.msra.mxu0 0.0
        %492 = vmatprep.subr.mxu0 0.0
        %493 = vmatpush2.xpose.msra.mxu0 0.0
        %494 = vmatprep.subr.mxu0 0.0
        %495 = vmatpush2.xpose.msra.mxu0 0.0
        %496 = vmatprep.subr.mxu0 0.0
        %497 = vmatpush2.xpose.msra.mxu0 0.0
        %498 = vmatprep.subr.mxu0 0.0
        %499 = vmatpush2.xpose.msra.mxu0 0.0
        %500 = vmatprep.subr.mxu0 0.0
        %501 = vmatpush2.xpose.msra.mxu0 0.0
        %502 = vmatprep.subr.mxu0 0.0
        %503 = vmatpush2.xpose.msra.mxu0 0.0
        %504 = vmatprep.subr.mxu0 0.0
        %505 = vmatpush2.xpose.msra.mxu0 0.0
        %506 = vmatprep.subr.mxu0 0.0
        %507 = vmatpush2.xpose.msra.mxu0 0.0
        %508 = vmatprep.mubr.f32.mxu0 0.0
        %509 = vmatmul.mubr.f32.gmra.mxu0 %v373
        %v510 = vpop.f32.mrf.mxu0
        %v511 = vadd.f32 %v334, %v510
        %v512 = vpop.f32.mrf.mxu0
        %513 = vmatprep.mubr.f32.mxu0 0.0
        %514 = vmatmul.mubr.f32.gmra.mxu0 %v376
        %v515 = vpop.f32.mrf.mxu0
        %v516 = vadd.f32 %v339, %v515
        %v517 = vpop.f32.mrf.mxu0
        %518 = vmatprep.mubr.f32.mxu0 0.0
        %519 = vmatmul.mubr.f32.gmra.mxu0 %v379
        %v520 = vpop.f32.mrf.mxu0
        %v521 = vadd.f32 %v344, %v520
        %v522 = vpop.f32.mrf.mxu0
        %523 = vmatprep.mubr.f32.mxu0 0.0
        %524 = vmatmul.mubr.f32.gmra.mxu0 %v382
        %v525 = vpop.f32.mrf.mxu0
        %v526 = vadd.f32 %v349, %v525
        %v527 = vpop.f32.mrf.mxu0
        %528 = vmatprep.mubr.f32.mxu0 0.0
        %529 = vmatmul.mubr.f32.gmra.mxu0 %v385
        %v530 = vpop.f32.mrf.mxu0
        %v531 = vadd.f32 %v354, %v530
        %v532 = vpop.f32.mrf.mxu0
        %533 = vmatprep.mubr.f32.mxu0 0.0
        %534 = vmatmul.mubr.f32.gmra.mxu0 %v388
        %v535 = vpop.f32.mrf.mxu0
        %v536 = vadd.f32 %v359, %v535
        %v537 = vpop.f32.mrf.mxu0
        %538 = vmatprep.mubr.f32.mxu0 0.0
        %539 = vmatmul.mubr.f32.gmra.mxu0 %v391
        %v540 = vpop.f32.mrf.mxu0
        %v541 = vadd.f32 %v364, %v540
        %v542 = vpop.f32.mrf.mxu0
        %543 = vmatprep.mubr.f32.mxu0 0.0
        %544 = vmatmul.mubr.f32.gmra.mxu0 %v394
        %v545 = vpop.f32.mrf.mxu0
        %v546 = vadd.f32 %v369, %v545
        %v547 = vpop.f32.mrf.mxu0
        %548 = vdwg.mxu0
        %v549 = vtanh.pop %v511
        %v550 = vtanh.pop %v516
        %v551 = vtanh.pop %v521
        %v552 = vtanh.pop %v526
        %v553 = vtanh.pop %v531
        %v554 = vtanh.pop %v536
        %v555 = vtanh.pop %v541
        %v556 = vtanh.pop %v546
        %v557 = vld [vmem:[%s3] sm:$0xff]
        %v558 = vld [vmem:[%s3 + $0x8] sm:$0xff]
        %v559 = vld [vmem:[%s3 + $0x10] sm:$0xff]
        %v560 = vld [vmem:[%s3 + $0x18] sm:$0xff]
        %v561 = vld [vmem:[%s3 + $0x20] sm:$0xff]
        %v562 = vld [vmem:[%s3 + $0x28] sm:$0xff]
        %v563 = vld [vmem:[%s3 + $0x30] sm:$0xff]
        %v564 = vld [vmem:[%s3 + $0x38] sm:$0xff]
        %v565 = vld [vmem:[%s4] sm:$0xff]
        %v566 = vld [vmem:[%s4 + $0x8] sm:$0xff]
        %v567 = vld [vmem:[%s4 + $0x10] sm:$0xff]
        %v568 = vld [vmem:[%s4 + $0x18] sm:$0xff]
        %v569 = vld [vmem:[%s4 + $0x20] sm:$0xff]
        %v570 = vld [vmem:[%s4 + $0x28] sm:$0xff]
        %v571 = vld [vmem:[%s4 + $0x30] sm:$0xff]
        %v572 = vld [vmem:[%s4 + $0x38] sm:$0xff]
        %574 = vset.pattern.permute.xlu0 0
        %575 = vperm.xlu0 %574, %v565
        %v576 = vpop.permute.xlu0 %575
        %579 = vset.pattern.permute.xlu0 0
        %580 = vperm.xlu0 %579, %v566
        %v581 = vpop.permute.xlu0 %580
        %584 = vset.pattern.permute.xlu0 0
        %585 = vperm.xlu0 %584, %v567
        %v586 = vpop.permute.xlu0 %585
        %589 = vset.pattern.permute.xlu0 0
        %590 = vperm.xlu0 %589, %v568
        %v591 = vpop.permute.xlu0 %590
        %594 = vset.pattern.permute.xlu0 0
        %595 = vperm.xlu0 %594, %v569
        %v596 = vpop.permute.xlu0 %595
        %599 = vset.pattern.permute.xlu0 0
        %600 = vperm.xlu0 %599, %v570
        %v601 = vpop.permute.xlu0 %600
        %604 = vset.pattern.permute.xlu0 0
        %605 = vperm.xlu0 %604, %v571
        %v606 = vpop.permute.xlu0 %605
        %609 = vset.pattern.permute.xlu0 0
        %610 = vperm.xlu0 %609, %v572
        %v611 = vpop.permute.xlu0 %610
        %vm613 = vcmask 523264
        %v615 = vsel %vm613, %v557, 0
        %v618 = vsel %vm613, %v558, 0
        %v621 = vsel %vm613, %v559, 0
        %v624 = vsel %vm613, %v560, 0
        %v627 = vsel %vm613, %v561, 0
        %v630 = vsel %vm613, %v562, 0
        %v633 = vsel %vm613, %v563, 0
        %v636 = vsel %vm613, %v564, 0
        %638 = vmatprep.subr.mxu0 0.0
        %639 = vmatpush1.msra.mxu0 0.0
        %640 = vmatprep.subr.mxu0 0.0
        %641 = vmatpush1.msra.mxu0 0.0
        %642 = vmatprep.subr.mxu0 0.0
        %643 = vmatpush1.msra.mxu0 0.0
        %644 = vmatprep.subr.mxu0 0.0
        %645 = vmatpush1.msra.mxu0 0.0
        %646 = vmatprep.subr.mxu0 0.0
        %647 = vmatpush1.msra.mxu0 0.0
        %648 = vmatprep.subr.mxu0 0.0
        %649 = vmatpush1.msra.mxu0 0.0
        %650 = vmatprep.subr.mxu0 0.0
        %651 = vmatpush1.msra.mxu0 0.0
        %652 = vmatprep.subr.mxu0 0.0
        %653 = vmatpush1.msra.mxu0 0.0
        %654 = vmatprep.subr.mxu0 0.0
        %655 = vmatpush1.msra.mxu0 %v556
        %656 = vmatprep.subr.mxu0 0.0
        %657 = vmatpush1.msra.mxu0 %v555
        %658 = vmatprep.subr.mxu0 0.0
        %659 = vmatpush1.msra.mxu0 %v554
        %660 = vmatprep.subr.mxu0 0.0
        %661 = vmatpush1.msra.mxu0 %v553
        %662 = vmatprep.subr.mxu0 0.0
        %663 = vmatpush1.msra.mxu0 %v552
        %664 = vmatprep.subr.mxu0 0.0
        %665 = vmatpush1.msra.mxu0 %v551
        %666 = vmatprep.subr.mxu0 0.0
        %667 = vmatpush1.msra.mxu0 %v550
        %668 = vmatprep.subr.mxu0 0.0
        %669 = vmatpush1.msra.mxu0 %v549
        %670 = vmatprep.subr.mxu0 0.0
        %671 = vmatpush2.msra.mxu0 0.0
        %672 = vmatprep.subr.mxu0 0.0
        %673 = vmatpush2.msra.mxu0 0.0
        %674 = vmatprep.subr.mxu0 0.0
        %675 = vmatpush2.msra.mxu0 0.0
        %676 = vmatprep.subr.mxu0 0.0
        %677 = vmatpush2.msra.mxu0 0.0
        %678 = vmatprep.subr.mxu0 0.0
        %679 = vmatpush2.msra.mxu0 0.0
        %680 = vmatprep.subr.mxu0 0.0
        %681 = vmatpush2.msra.mxu0 0.0
        %682 = vmatprep.subr.mxu0 0.0
        %683 = vmatpush2.msra.mxu0 0.0
        %684 = vmatprep.subr.mxu0 0.0
        %685 = vmatpush2.msra.mxu0 0.0
        %686 = vmatprep.subr.mxu0 0.0
        %687 = vmatpush2.msra.mxu0 0.0
        %688 = vmatprep.subr.mxu0 0.0
        %689 = vmatpush2.msra.mxu0 0.0
        %690 = vmatprep.subr.mxu0 0.0
        %691 = vmatpush2.msra.mxu0 0.0
        %692 = vmatprep.subr.mxu0 0.0
        %693 = vmatpush2.msra.mxu0 0.0
        %694 = vmatprep.subr.mxu0 0.0
        %695 = vmatpush2.msra.mxu0 0.0
        %696 = vmatprep.subr.mxu0 0.0
        %697 = vmatpush2.msra.mxu0 0.0
        %698 = vmatprep.subr.mxu0 0.0
        %699 = vmatpush2.msra.mxu0 0.0
        %700 = vmatprep.subr.mxu0 0.0
        %701 = vmatpush2.msra.mxu0 0.0
        %702 = vmatprep.mubr.f32.mxu0 0.0
        %703 = vmatmul.mubr.f32.gmra.mxu0 %v615
        %v704 = vpop.f32.mrf.mxu0
        %v705 = vadd.f32 %v576, %v704
        %v706 = vpop.f32.mrf.mxu0
        %707 = vmatprep.mubr.f32.mxu0 0.0
        %708 = vmatmul.mubr.f32.gmra.mxu0 %v618
        %v709 = vpop.f32.mrf.mxu0
        %v710 = vadd.f32 %v581, %v709
        %v711 = vpop.f32.mrf.mxu0
        %712 = vmatprep.mubr.f32.mxu0 0.0
        %713 = vmatmul.mubr.f32.gmra.mxu0 %v621
        %v714 = vpop.f32.mrf.mxu0
        %v715 = vadd.f32 %v586, %v714
        %v716 = vpop.f32.mrf.mxu0
        %717 = vmatprep.mubr.f32.mxu0 0.0
        %718 = vmatmul.mubr.f32.gmra.mxu0 %v624
        %v719 = vpop.f32.mrf.mxu0
        %v720 = vadd.f32 %v591, %v719
        %v721 = vpop.f32.mrf.mxu0
        %722 = vmatprep.mubr.f32.mxu0 0.0
        %723 = vmatmul.mubr.f32.gmra.mxu0 %v627
        %v724 = vpop.f32.mrf.mxu0
        %v725 = vadd.f32 %v596, %v724
        %v726 = vpop.f32.mrf.mxu0
        %727 = vmatprep.mubr.f32.mxu0 0.0
        %728 = vmatmul.mubr.f32.gmra.mxu0 %v630
        %v729 = vpop.f32.mrf.mxu0
        %v730 = vadd.f32 %v601, %v729
        %v731 = vpop.f32.mrf.mxu0
        %732 = vmatprep.mubr.f32.mxu0 0.0
        %733 = vmatmul.mubr.f32.gmra.mxu0 %v633
        %v734 = vpop.f32.mrf.mxu0
        %v735 = vadd.f32 %v606, %v734
        %v736 = vpop.f32.mrf.mxu0
        %737 = vmatprep.mubr.f32.mxu0 0.0
        %738 = vmatmul.mubr.f32.gmra.mxu0 %v636
        %v739 = vpop.f32.mrf.mxu0
        %v740 = vadd.f32 %v611, %v739
        %v741 = vpop.f32.mrf.mxu0
        %742 = vdwg.mxu0
        %v743 = vtanh.pop %v705
        %v744 = vtanh.pop %v710
        %v745 = vtanh.pop %v715
        %v746 = vtanh.pop %v720
        %v747 = vtanh.pop %v725
        %v748 = vtanh.pop %v730
        %v749 = vtanh.pop %v735
        %v750 = vtanh.pop %v740
        %v751 = vld [vmem:[%s5] sm:$0xff]
        %v752 = vld [vmem:[%s5 + $0x8] sm:$0xff]
        %v753 = vld [vmem:[%s5 + $0x10] sm:$0xff]
        %v754 = vld [vmem:[%s5 + $0x18] sm:$0xff]
        %v755 = vld [vmem:[%s5 + $0x20] sm:$0xff]
        %v756 = vld [vmem:[%s5 + $0x28] sm:$0xff]
        %v757 = vld [vmem:[%s5 + $0x30] sm:$0xff]
        %v758 = vld [vmem:[%s5 + $0x38] sm:$0xff]
        %760 = vset.pattern.permute.xlu0 0
        %761 = vperm.xlu0 %760, %v751
        %v762 = vpop.permute.xlu0 %761
        %765 = vset.pattern.permute.xlu0 0
        %766 = vperm.xlu0 %765, %v752
        %v767 = vpop.permute.xlu0 %766
        %770 = vset.pattern.permute.xlu0 0
        %771 = vperm.xlu0 %770, %v753
        %v772 = vpop.permute.xlu0 %771
        %775 = vset.pattern.permute.xlu0 0
        %776 = vperm.xlu0 %775, %v754
        %v777 = vpop.permute.xlu0 %776
        %780 = vset.pattern.permute.xlu0 0
        %781 = vperm.xlu0 %780, %v755
        %v782 = vpop.permute.xlu0 %781
        %785 = vset.pattern.permute.xlu0 0
        %786 = vperm.xlu0 %785, %v756
        %v787 = vpop.permute.xlu0 %786
        %790 = vset.pattern.permute.xlu0 0
        %791 = vperm.xlu0 %790, %v757
        %v792 = vpop.permute.xlu0 %791
        %795 = vset.pattern.permute.xlu0 0
        %796 = vperm.xlu0 %795, %v758
        %v797 = vpop.permute.xlu0 %796
        %v799 = vmul.f32 %v743, %v762
        %v800 = vmul.f32 %v744, %v767
        %v801 = vmul.f32 %v745, %v772
        %v802 = vmul.f32 %v746, %v777
        %v803 = vmul.f32 %v747, %v782
        %v804 = vmul.f32 %v748, %v787
        %v805 = vmul.f32 %v749, %v792
        %v806 = vmul.f32 %v750, %v797
        %v807 = vadd.f32 %v799, %v800
        %v808 = vadd.f32 %v807, %v801
        %v809 = vadd.f32 %v808, %v802
        %v810 = vadd.f32 %v809, %v803
        %v811 = vadd.f32 %v810, %v804
        %v812 = vadd.f32 %v811, %v805
        %v813 = vadd.f32 %v812, %v806
        %v814 = vrot.slane %v813, 4
        %v815 = vadd.f32 %v813, %v814
        %v816 = vrot.slane %v815, 2
        %v817 = vadd.f32 %v815, %v816
        %v818 = vrot.slane %v817, 1
        %v819 = vadd.f32 %v817, %v818
        %s820 = sld [smem:[#allocation2]]
        %v821 = vstv %s820
        %v822 = vadd.f32 %v819, %v821
        %823 = vst [vmem:[%s284] sm:$0x1] %v822
        %s824 = sand.u32 %s182, 1
        %s825 = scalar_lea.sflag [#allocation4], %s824
        %s826 = sand.u32 %s182, 1
        %s827 = scalar_lea.vmem [#allocation3], %s826
        // Predicated region
        $region49: #{tpu_custom_call.1} parent=47 // pred_check
          %p828 = pneg %p192
        $region50: #{tpu_custom_call.1} parent=47 // pred_check_branch
          %830 = sbr.rel (%p828) target = $region52
        $region51: #{tpu_custom_call.1} parent=47 // pred_region
          %s832 = ssub.s32 16, 16
          %833 = vsyncadd %s825, %s832
          %s834 = smul.addr %s22, 16
          %s835 = scalar_lea.hbm %s7, %s834
          %s837 = sshll.u32 %s827, 4
          %s838 = int_to_ptr.vmem [resolvable:$true] %s837
          %840 = dma.vmem_to_hbm [thread:$0]  %s838, 16, %s835, %s825
        $region52: #{tpu_custom_call.1} parent=47 // pred_fallthru
          _
      $region48: #{tpu_custom_call.1} parent=5 // pred_fallthru
        _
      %p841 = scmp.le.s32.totalorder 2, %s17
      // Predicated region
      $region53: #{tpu_custom_call.1} parent=5 // pred_check
        %p842 = pneg %p841
      $region54: #{tpu_custom_call.1} parent=5 // pred_check_branch
        %844 = sbr.rel (%p842) target = $region56
      $region55: #{tpu_custom_call.1} parent=5 // pred_region
        %s845 = ssub.s32 %s17, 2
        // Predicated region
        $region57: #{tpu_custom_call.1} parent=55 // pred_check
          %p846 = pneg %p198
        $region58: #{tpu_custom_call.1} parent=55 // pred_check_branch
          %848 = sbr.rel (%p846) target = $region60
        $region59: #{tpu_custom_call.1} parent=55 // pred_region
          %s849 = sand.u32 %s183, 1
          %s850 = scalar_lea.sflag [#allocation4], %s849
          %s851 = sand.u32 %s183, 1
          %s852 = scalar_lea.vmem [#allocation3], %s851
          %853 = dma.done %s850, 16
        $region60: #{tpu_custom_call.1} parent=55 // pred_fallthru
          _
      $region56: #{tpu_custom_call.1} parent=5 // pred_fallthru
        _
    $region6: #{tpu_custom_call.1} parent=1 // loop_footer
      %s21 = sadd.s32 1, %s17
    $region7: #{tpu_custom_call.1} parent=1 // loop_footer_branch
      %16 = sbr.rel target = $region3
    $region8: #{tpu_custom_call.1} parent=1 // loop_exit
      _
    %854 = vsyncpa [#allocation4], 1
    %s855 = scalar_lea.sflag [#allocation4], 1
    %856 = vsyncpa %s855, 1

</llo_original>
